<compile_context>
chip_gen: v5e
topology: v5e:2x2
jax: 0.10.0
libtpu: 0.0.40
codegen_flags: <defaults>
</compile_context>

<pallas_src>
import jax
import jax.numpy as jnp
from jax.experimental import pallas as pl
from jax.experimental.pallas import tpu as pltpu


def _make_n_to_n_kernel(n1, c1, o1, n2, c2, o2):
    def kernel(x1_ref, w1_ref, x2_ref, w2_ref, y1_ref, y2_ref):
        # x*_ref: VMEM (N*C_in, HW); w*_ref: SMEM (C_out*C_in,);
        # y*_ref: VMEM (N*C_out, HW) -- lane dim = HW, fully lane-dense stores.
        def conv(x_ref, w_ref, y_ref, n, ci, co):
            for b in range(n):                          # static unroll over batch
                xb = x_ref[b * ci:(b + 1) * ci, :]      # (C_in, HW) single load
                for o in range(co):                     # static unroll over out-chan
                    acc = xb[0:1, :] * w_ref[o * ci]    # SMEM scalar bcast on VPU
                    for c in range(1, ci):
                        acc = acc + xb[c:c + 1, :] * w_ref[o * ci + c]
                    row = b * co + o
                    y_ref[row:row + 1, :] = acc.astype(y_ref.dtype)

        conv(x1_ref, w1_ref, y1_ref, n1, c1, o1)
        conv(x2_ref, w2_ref, y2_ref, n2, c2, o2)

    return kernel


def n_to_n_forward(x1, x2, w1, w2):
    """w1, w2: PyTorch-layout Conv2d weights of shape (C_out, C_in, 1, 1)."""
    n1, c1, h1, wd1 = x1.shape
    n2, c2, h2, wd2 = x2.shape
    o1, o2 = w1.shape[0], w2.shape[0]
    hw1, hw2 = h1 * wd1, h2 * wd2

    # Free reshapes of contiguous NCHW: pixels -> lanes, batch*chan -> sublanes.
    x1m = x1.reshape(n1 * c1, hw1)
    x2m = x2.reshape(n2 * c2, hw2)
    # Tiny weights flattened row-major: w[o, c] -> w_flat[o * C_in + c].
    w1f = w1.reshape(o1 * c1)
    w2f = w2.reshape(o2 * c2)

    flops = 2 * (n1 * o1 * c1 * hw1 + n2 * o2 * c2 * hw2)
    bytes_accessed = (
        x1m.size * x1m.dtype.itemsize + x2m.size * x2m.dtype.itemsize
        + w1f.size * w1f.dtype.itemsize + w2f.size * w2f.dtype.itemsize
        + n1 * o1 * hw1 * x1.dtype.itemsize + n2 * o2 * hw2 * x2.dtype.itemsize
    )

    vmem = pltpu.MemorySpace.VMEM
    smem = pltpu.MemorySpace.SMEM
    y1m, y2m = pl.pallas_call(
        _make_n_to_n_kernel(n1, c1, o1, n2, c2, o2),
        out_shape=(
            jax.ShapeDtypeStruct((n1 * o1, hw1), x1.dtype),
            jax.ShapeDtypeStruct((n2 * o2, hw2), x2.dtype),
        ),
        in_specs=[
            pl.BlockSpec(memory_space=vmem),
            pl.BlockSpec(memory_space=smem),
            pl.BlockSpec(memory_space=vmem),
            pl.BlockSpec(memory_space=smem),
        ],
        out_specs=(
            pl.BlockSpec(memory_space=vmem),
            pl.BlockSpec(memory_space=vmem),
        ),
        cost_estimate=pl.CostEstimate(
            flops=flops, transcendentals=0, bytes_accessed=bytes_accessed),
    )(x1m, w1f, x2m, w2f)

    # Free reshapes back to NCHW.
    return y1m.reshape(n1, o1, h1, wd1), y2m.reshape(n2, o2, h2, wd2)


if __name__ == "__main__":
    key = jax.random.PRNGKey(0)
    k1, k2, kw1, kw2 = jax.random.split(key, 4)

    # Small shapes consistent with Conv2d(3, 3, 1, 1): NCHW, 3 channels.
    x1 = jax.random.normal(k1, (2, 3, 16, 16), dtype=jnp.float32)
    x2 = jax.random.normal(k2, (2, 3, 16, 16), dtype=jnp.float32)

    # Deterministic weights, shape (C_out, C_in, 1, 1) as in nn.Conv2d.
    w1 = jax.random.normal(kw1, (3, 3, 1, 1), dtype=jnp.float32) * 0.1
    w2 = jax.random.normal(kw2, (3, 3, 1, 1), dtype=jnp.float32) * 0.1

    y1, y2 = n_to_n_forward(x1, x2, w1, w2)
    jax.block_until_ready((y1, y2))

    # Reference check (plain JAX einsum == 1x1 conv, no bias).
    ref1 = jnp.einsum("nchw,oc->nohw", x1, w1[:, :, 0, 0])
    ref2 = jnp.einsum("nchw,oc->nohw", x2, w2[:, :, 0, 0])
    assert y1.shape == (2, 3, 16, 16) and y2.shape == (2, 3, 16, 16)
    assert jnp.allclose(y1, ref1, atol=1e-5, rtol=1e-5)
    assert jnp.allclose(y2, ref2, atol=1e-5, rtol=1e-5)

    print("KERNEL_OK")
</pallas_src>

<mosaic_0001>
module attributes {stable_mosaic.version = 11 : i64} {
  func.func @kernel(%arg0: memref<6x256xf32, #tpu.memory_space<vmem>>, %arg1: memref<9xf32, #tpu.memory_space<smem>>, %arg2: memref<6x256xf32, #tpu.memory_space<vmem>>, %arg3: memref<9xf32, #tpu.memory_space<smem>>, %arg4: memref<6x256xf32, #tpu.memory_space<vmem>>, %arg5: memref<6x256xf32, #tpu.memory_space<vmem>>) attributes {dimension_semantics = [], scalar_prefetch = 0 : i64, scratch_operands = 0 : i64, tpu.core_type = #tpu.core_type<tc>} {
    %c0 = arith.constant 0 : index
    %c0_0 = arith.constant 0 : index
    %0 = vector.load %arg0[%c0, %c0_0] : memref<6x256xf32, #tpu.memory_space<vmem>>, vector<3x256xf32>
    %1 = vector.extract_strided_slice %0 {offsets = [0, 0], sizes = [1, 256], strides = [1, 1]} : vector<3x256xf32> to vector<1x256xf32>
    %c0_1 = arith.constant 0 : index
    %2 = memref.load %arg1[%c0_1] : memref<9xf32, #tpu.memory_space<smem>>
    %3 = vector.broadcast %2 : f32 to vector<1x256xf32>
    %4 = arith.mulf %1, %3 : vector<1x256xf32>
    %5 = vector.extract_strided_slice %0 {offsets = [1, 0], sizes = [1, 256], strides = [1, 1]} : vector<3x256xf32> to vector<1x256xf32>
    %c1 = arith.constant 1 : index
    %6 = memref.load %arg1[%c1] : memref<9xf32, #tpu.memory_space<smem>>
    %7 = vector.broadcast %6 : f32 to vector<1x256xf32>
    %8 = arith.mulf %5, %7 : vector<1x256xf32>
    %9 = arith.addf %4, %8 : vector<1x256xf32>
    %10 = vector.extract_strided_slice %0 {offsets = [2, 0], sizes = [1, 256], strides = [1, 1]} : vector<3x256xf32> to vector<1x256xf32>
    %c2 = arith.constant 2 : index
    %11 = memref.load %arg1[%c2] : memref<9xf32, #tpu.memory_space<smem>>
    %12 = vector.broadcast %11 : f32 to vector<1x256xf32>
    %13 = arith.mulf %10, %12 : vector<1x256xf32>
    %14 = arith.addf %9, %13 : vector<1x256xf32>
    %c0_2 = arith.constant 0 : index
    %c0_3 = arith.constant 0 : index
    %15 = vector.load %arg4[%c0_2, %c0_3] : memref<6x256xf32, #tpu.memory_space<vmem>>, vector<1x256xf32>
    tpu.vector_store %arg4[%c0_2, %c0_3], %14 {strides = array<i32>} : memref<6x256xf32, #tpu.memory_space<vmem>>, vector<1x256xf32>,
    %16 = vector.extract_strided_slice %0 {offsets = [0, 0], sizes = [1, 256], strides = [1, 1]} : vector<3x256xf32> to vector<1x256xf32>
    %c3 = arith.constant 3 : index
    %17 = memref.load %arg1[%c3] : memref<9xf32, #tpu.memory_space<smem>>
    %18 = vector.broadcast %17 : f32 to vector<1x256xf32>
    %19 = arith.mulf %16, %18 : vector<1x256xf32>
    %20 = vector.extract_strided_slice %0 {offsets = [1, 0], sizes = [1, 256], strides = [1, 1]} : vector<3x256xf32> to vector<1x256xf32>
    %c4 = arith.constant 4 : index
    %21 = memref.load %arg1[%c4] : memref<9xf32, #tpu.memory_space<smem>>
    %22 = vector.broadcast %21 : f32 to vector<1x256xf32>
    %23 = arith.mulf %20, %22 : vector<1x256xf32>
    %24 = arith.addf %19, %23 : vector<1x256xf32>
    %25 = vector.extract_strided_slice %0 {offsets = [2, 0], sizes = [1, 256], strides = [1, 1]} : vector<3x256xf32> to vector<1x256xf32>
    %c5 = arith.constant 5 : index
    %26 = memref.load %arg1[%c5] : memref<9xf32, #tpu.memory_space<smem>>
    %27 = vector.broadcast %26 : f32 to vector<1x256xf32>
    %28 = arith.mulf %25, %27 : vector<1x256xf32>
    %29 = arith.addf %24, %28 : vector<1x256xf32>
    %c1_4 = arith.constant 1 : index
    %c0_5 = arith.constant 0 : index
    %30 = vector.load %arg4[%c1_4, %c0_5] : memref<6x256xf32, #tpu.memory_space<vmem>>, vector<1x256xf32>
    tpu.vector_store %arg4[%c1_4, %c0_5], %29 {strides = array<i32>} : memref<6x256xf32, #tpu.memory_space<vmem>>, vector<1x256xf32>,
    %31 = vector.extract_strided_slice %0 {offsets = [0, 0], sizes = [1, 256], strides = [1, 1]} : vector<3x256xf32> to vector<1x256xf32>
    %c6 = arith.constant 6 : index
    %32 = memref.load %arg1[%c6] : memref<9xf32, #tpu.memory_space<smem>>
    %33 = vector.broadcast %32 : f32 to vector<1x256xf32>
    %34 = arith.mulf %31, %33 : vector<1x256xf32>
    %35 = vector.extract_strided_slice %0 {offsets = [1, 0], sizes = [1, 256], strides = [1, 1]} : vector<3x256xf32> to vector<1x256xf32>
    %c7 = arith.constant 7 : index
    %36 = memref.load %arg1[%c7] : memref<9xf32, #tpu.memory_space<smem>>
    %37 = vector.broadcast %36 : f32 to vector<1x256xf32>
    %38 = arith.mulf %35, %37 : vector<1x256xf32>
    %39 = arith.addf %34, %38 : vector<1x256xf32>
    %40 = vector.extract_strided_slice %0 {offsets = [2, 0], sizes = [1, 256], strides = [1, 1]} : vector<3x256xf32> to vector<1x256xf32>
    %c8 = arith.constant 8 : index
    %41 = memref.load %arg1[%c8] : memref<9xf32, #tpu.memory_space<smem>>
    %42 = vector.broadcast %41 : f32 to vector<1x256xf32>
    %43 = arith.mulf %40, %42 : vector<1x256xf32>
    %44 = arith.addf %39, %43 : vector<1x256xf32>
    %c2_6 = arith.constant 2 : index
    %c0_7 = arith.constant 0 : index
    %45 = vector.load %arg4[%c2_6, %c0_7] : memref<6x256xf32, #tpu.memory_space<vmem>>, vector<1x256xf32>
    tpu.vector_store %arg4[%c2_6, %c0_7], %44 {strides = array<i32>} : memref<6x256xf32, #tpu.memory_space<vmem>>, vector<1x256xf32>,
    %c3_8 = arith.constant 3 : index
    %c0_9 = arith.constant 0 : index
    %46 = vector.load %arg0[%c3_8, %c0_9] : memref<6x256xf32, #tpu.memory_space<vmem>>, vector<3x256xf32>
    %47 = vector.extract_strided_slice %46 {offsets = [0, 0], sizes = [1, 256], strides = [1, 1]} : vector<3x256xf32> to vector<1x256xf32>
    %c0_10 = arith.constant 0 : index
    %48 = memref.load %arg1[%c0_10] : memref<9xf32, #tpu.memory_space<smem>>
    %49 = vector.broadcast %48 : f32 to vector<1x256xf32>
    %50 = arith.mulf %47, %49 : vector<1x256xf32>
    %51 = vector.extract_strided_slice %46 {offsets = [1, 0], sizes = [1, 256], strides = [1, 1]} : vector<3x256xf32> to vector<1x256xf32>
    %c1_11 = arith.constant 1 : index
    %52 = memref.load %arg1[%c1_11] : memref<9xf32, #tpu.memory_space<smem>>
    %53 = vector.broadcast %52 : f32 to vector<1x256xf32>
    %54 = arith.mulf %51, %53 : vector<1x256xf32>
    %55 = arith.addf %50, %54 : vector<1x256xf32>
    %56 = vector.extract_strided_slice %46 {offsets = [2, 0], sizes = [1, 256], strides = [1, 1]} : vector<3x256xf32> to vector<1x256xf32>
    %c2_12 = arith.constant 2 : index
    %57 = memref.load %arg1[%c2_12] : memref<9xf32, #tpu.memory_space<smem>>
    %58 = vector.broadcast %57 : f32 to vector<1x256xf32>
    %59 = arith.mulf %56, %58 : vector<1x256xf32>
    %60 = arith.addf %55, %59 : vector<1x256xf32>
    %c3_13 = arith.constant 3 : index
    %c0_14 = arith.constant 0 : index
    %61 = vector.load %arg4[%c3_13, %c0_14] : memref<6x256xf32, #tpu.memory_space<vmem>>, vector<1x256xf32>
    tpu.vector_store %arg4[%c3_13, %c0_14], %60 {strides = array<i32>} : memref<6x256xf32, #tpu.memory_space<vmem>>, vector<1x256xf32>,
    %62 = vector.extract_strided_slice %46 {offsets = [0, 0], sizes = [1, 256], strides = [1, 1]} : vector<3x256xf32> to vector<1x256xf32>
    %c3_15 = arith.constant 3 : index
    %63 = memref.load %arg1[%c3_15] : memref<9xf32, #tpu.memory_space<smem>>
    %64 = vector.broadcast %63 : f32 to vector<1x256xf32>
    %65 = arith.mulf %62, %64 : vector<1x256xf32>
    %66 = vector.extract_strided_slice %46 {offsets = [1, 0], sizes = [1, 256], strides = [1, 1]} : vector<3x256xf32> to vector<1x256xf32>
    %c4_16 = arith.constant 4 : index
    %67 = memref.load %arg1[%c4_16] : memref<9xf32, #tpu.memory_space<smem>>
    %68 = vector.broadcast %67 : f32 to vector<1x256xf32>
    %69 = arith.mulf %66, %68 : vector<1x256xf32>
    %70 = arith.addf %65, %69 : vector<1x256xf32>
    %71 = vector.extract_strided_slice %46 {offsets = [2, 0], sizes = [1, 256], strides = [1, 1]} : vector<3x256xf32> to vector<1x256xf32>
    %c5_17 = arith.constant 5 : index
    %72 = memref.load %arg1[%c5_17] : memref<9xf32, #tpu.memory_space<smem>>
    %73 = vector.broadcast %72 : f32 to vector<1x256xf32>
    %74 = arith.mulf %71, %73 : vector<1x256xf32>
    %75 = arith.addf %70, %74 : vector<1x256xf32>
    %c4_18 = arith.constant 4 : index
    %c0_19 = arith.constant 0 : index
    %76 = vector.load %arg4[%c4_18, %c0_19] : memref<6x256xf32, #tpu.memory_space<vmem>>, vector<1x256xf32>
    tpu.vector_store %arg4[%c4_18, %c0_19], %75 {strides = array<i32>} : memref<6x256xf32, #tpu.memory_space<vmem>>, vector<1x256xf32>,
    %77 = vector.extract_strided_slice %46 {offsets = [0, 0], sizes = [1, 256], strides = [1, 1]} : vector<3x256xf32> to vector<1x256xf32>
    %c6_20 = arith.constant 6 : index
    %78 = memref.load %arg1[%c6_20] : memref<9xf32, #tpu.memory_space<smem>>
    %79 = vector.broadcast %78 : f32 to vector<1x256xf32>
    %80 = arith.mulf %77, %79 : vector<1x256xf32>
    %81 = vector.extract_strided_slice %46 {offsets = [1, 0], sizes = [1, 256], strides = [1, 1]} : vector<3x256xf32> to vector<1x256xf32>
    %c7_21 = arith.constant 7 : index
    %82 = memref.load %arg1[%c7_21] : memref<9xf32, #tpu.memory_space<smem>>
    %83 = vector.broadcast %82 : f32 to vector<1x256xf32>
    %84 = arith.mulf %81, %83 : vector<1x256xf32>
    %85 = arith.addf %80, %84 : vector<1x256xf32>
    %86 = vector.extract_strided_slice %46 {offsets = [2, 0], sizes = [1, 256], strides = [1, 1]} : vector<3x256xf32> to vector<1x256xf32>
    %c8_22 = arith.constant 8 : index
    %87 = memref.load %arg1[%c8_22] : memref<9xf32, #tpu.memory_space<smem>>
    %88 = vector.broadcast %87 : f32 to vector<1x256xf32>
    %89 = arith.mulf %86, %88 : vector<1x256xf32>
    %90 = arith.addf %85, %89 : vector<1x256xf32>
    %c5_23 = arith.constant 5 : index
    %c0_24 = arith.constant 0 : index
    %91 = vector.load %arg4[%c5_23, %c0_24] : memref<6x256xf32, #tpu.memory_space<vmem>>, vector<1x256xf32>
    tpu.vector_store %arg4[%c5_23, %c0_24], %90 {strides = array<i32>} : memref<6x256xf32, #tpu.memory_space<vmem>>, vector<1x256xf32>,
    %c0_25 = arith.constant 0 : index
    %c0_26 = arith.constant 0 : index
    %92 = vector.load %arg2[%c0_25, %c0_26] : memref<6x256xf32, #tpu.memory_space<vmem>>, vector<3x256xf32>
    %93 = vector.extract_strided_slice %92 {offsets = [0, 0], sizes = [1, 256], strides = [1, 1]} : vector<3x256xf32> to vector<1x256xf32>
    %c0_27 = arith.constant 0 : index
    %94 = memref.load %arg3[%c0_27] : memref<9xf32, #tpu.memory_space<smem>>
    %95 = vector.broadcast %94 : f32 to vector<1x256xf32>
    %96 = arith.mulf %93, %95 : vector<1x256xf32>
    %97 = vector.extract_strided_slice %92 {offsets = [1, 0], sizes = [1, 256], strides = [1, 1]} : vector<3x256xf32> to vector<1x256xf32>
    %c1_28 = arith.constant 1 : index
    %98 = memref.load %arg3[%c1_28] : memref<9xf32, #tpu.memory_space<smem>>
    %99 = vector.broadcast %98 : f32 to vector<1x256xf32>
    %100 = arith.mulf %97, %99 : vector<1x256xf32>
    %101 = arith.addf %96, %100 : vector<1x256xf32>
    %102 = vector.extract_strided_slice %92 {offsets = [2, 0], sizes = [1, 256], strides = [1, 1]} : vector<3x256xf32> to vector<1x256xf32>
    %c2_29 = arith.constant 2 : index
    %103 = memref.load %arg3[%c2_29] : memref<9xf32, #tpu.memory_space<smem>>
    %104 = vector.broadcast %103 : f32 to vector<1x256xf32>
    %105 = arith.mulf %102, %104 : vector<1x256xf32>
    %106 = arith.addf %101, %105 : vector<1x256xf32>
    %c0_30 = arith.constant 0 : index
    %c0_31 = arith.constant 0 : index
    %107 = vector.load %arg5[%c0_30, %c0_31] : memref<6x256xf32, #tpu.memory_space<vmem>>, vector<1x256xf32>
    tpu.vector_store %arg5[%c0_30, %c0_31], %106 {strides = array<i32>} : memref<6x256xf32, #tpu.memory_space<vmem>>, vector<1x256xf32>,
    %108 = vector.extract_strided_slice %92 {offsets = [0, 0], sizes = [1, 256], strides = [1, 1]} : vector<3x256xf32> to vector<1x256xf32>
    %c3_32 = arith.constant 3 : index
    %109 = memref.load %arg3[%c3_32] : memref<9xf32, #tpu.memory_space<smem>>
    %110 = vector.broadcast %109 : f32 to vector<1x256xf32>
    %111 = arith.mulf %108, %110 : vector<1x256xf32>
    %112 = vector.extract_strided_slice %92 {offsets = [1, 0], sizes = [1, 256], strides = [1, 1]} : vector<3x256xf32> to vector<1x256xf32>
    %c4_33 = arith.constant 4 : index
    %113 = memref.load %arg3[%c4_33] : memref<9xf32, #tpu.memory_space<smem>>
    %114 = vector.broadcast %113 : f32 to vector<1x256xf32>
    %115 = arith.mulf %112, %114 : vector<1x256xf32>
    %116 = arith.addf %111, %115 : vector<1x256xf32>
    %117 = vector.extract_strided_slice %92 {offsets = [2, 0], sizes = [1, 256], strides = [1, 1]} : vector<3x256xf32> to vector<1x256xf32>
    %c5_34 = arith.constant 5 : index
    %118 = memref.load %arg3[%c5_34] : memref<9xf32, #tpu.memory_space<smem>>
    %119 = vector.broadcast %118 : f32 to vector<1x256xf32>
    %120 = arith.mulf %117, %119 : vector<1x256xf32>
    %121 = arith.addf %116, %120 : vector<1x256xf32>
    %c1_35 = arith.constant 1 : index
    %c0_36 = arith.constant 0 : index
    %122 = vector.load %arg5[%c1_35, %c0_36] : memref<6x256xf32, #tpu.memory_space<vmem>>, vector<1x256xf32>
    tpu.vector_store %arg5[%c1_35, %c0_36], %121 {strides = array<i32>} : memref<6x256xf32, #tpu.memory_space<vmem>>, vector<1x256xf32>,
    %123 = vector.extract_strided_slice %92 {offsets = [0, 0], sizes = [1, 256], strides = [1, 1]} : vector<3x256xf32> to vector<1x256xf32>
    %c6_37 = arith.constant 6 : index
    %124 = memref.load %arg3[%c6_37] : memref<9xf32, #tpu.memory_space<smem>>
    %125 = vector.broadcast %124 : f32 to vector<1x256xf32>
    %126 = arith.mulf %123, %125 : vector<1x256xf32>
    %127 = vector.extract_strided_slice %92 {offsets = [1, 0], sizes = [1, 256], strides = [1, 1]} : vector<3x256xf32> to vector<1x256xf32>
    %c7_38 = arith.constant 7 : index
    %128 = memref.load %arg3[%c7_38] : memref<9xf32, #tpu.memory_space<smem>>
    %129 = vector.broadcast %128 : f32 to vector<1x256xf32>
    %130 = arith.mulf %127, %129 : vector<1x256xf32>
    %131 = arith.addf %126, %130 : vector<1x256xf32>
    %132 = vector.extract_strided_slice %92 {offsets = [2, 0], sizes = [1, 256], strides = [1, 1]} : vector<3x256xf32> to vector<1x256xf32>
    %c8_39 = arith.constant 8 : index
    %133 = memref.load %arg3[%c8_39] : memref<9xf32, #tpu.memory_space<smem>>
    %134 = vector.broadcast %133 : f32 to vector<1x256xf32>
    %135 = arith.mulf %132, %134 : vector<1x256xf32>
    %136 = arith.addf %131, %135 : vector<1x256xf32>
    %c2_40 = arith.constant 2 : index
    %c0_41 = arith.constant 0 : index
    %137 = vector.load %arg5[%c2_40, %c0_41] : memref<6x256xf32, #tpu.memory_space<vmem>>, vector<1x256xf32>
    tpu.vector_store %arg5[%c2_40, %c0_41], %136 {strides = array<i32>} : memref<6x256xf32, #tpu.memory_space<vmem>>, vector<1x256xf32>,
    %c3_42 = arith.constant 3 : index
    %c0_43 = arith.constant 0 : index
    %138 = vector.load %arg2[%c3_42, %c0_43] : memref<6x256xf32, #tpu.memory_space<vmem>>, vector<3x256xf32>
    %139 = vector.extract_strided_slice %138 {offsets = [0, 0], sizes = [1, 256], strides = [1, 1]} : vector<3x256xf32> to vector<1x256xf32>
    %c0_44 = arith.constant 0 : index
    %140 = memref.load %arg3[%c0_44] : memref<9xf32, #tpu.memory_space<smem>>
    %141 = vector.broadcast %140 : f32 to vector<1x256xf32>
    %142 = arith.mulf %139, %141 : vector<1x256xf32>
    %143 = vector.extract_strided_slice %138 {offsets = [1, 0], sizes = [1, 256], strides = [1, 1]} : vector<3x256xf32> to vector<1x256xf32>
    %c1_45 = arith.constant 1 : index
    %144 = memref.load %arg3[%c1_45] : memref<9xf32, #tpu.memory_space<smem>>
    %145 = vector.broadcast %144 : f32 to vector<1x256xf32>
    %146 = arith.mulf %143, %145 : vector<1x256xf32>
    %147 = arith.addf %142, %146 : vector<1x256xf32>
    %148 = vector.extract_strided_slice %138 {offsets = [2, 0], sizes = [1, 256], strides = [1, 1]} : vector<3x256xf32> to vector<1x256xf32>
    %c2_46 = arith.constant 2 : index
    %149 = memref.load %arg3[%c2_46] : memref<9xf32, #tpu.memory_space<smem>>
    %150 = vector.broadcast %149 : f32 to vector<1x256xf32>
    %151 = arith.mulf %148, %150 : vector<1x256xf32>
    %152 = arith.addf %147, %151 : vector<1x256xf32>
    %c3_47 = arith.constant 3 : index
    %c0_48 = arith.constant 0 : index
    %153 = vector.load %arg5[%c3_47, %c0_48] : memref<6x256xf32, #tpu.memory_space<vmem>>, vector<1x256xf32>
    tpu.vector_store %arg5[%c3_47, %c0_48], %152 {strides = array<i32>} : memref<6x256xf32, #tpu.memory_space<vmem>>, vector<1x256xf32>,
    %154 = vector.extract_strided_slice %138 {offsets = [0, 0], sizes = [1, 256], strides = [1, 1]} : vector<3x256xf32> to vector<1x256xf32>
    %c3_49 = arith.constant 3 : index
    %155 = memref.load %arg3[%c3_49] : memref<9xf32, #tpu.memory_space<smem>>
    %156 = vector.broadcast %155 : f32 to vector<1x256xf32>
    %157 = arith.mulf %154, %156 : vector<1x256xf32>
    %158 = vector.extract_strided_slice %138 {offsets = [1, 0], sizes = [1, 256], strides = [1, 1]} : vector<3x256xf32> to vector<1x256xf32>
    %c4_50 = arith.constant 4 : index
    %159 = memref.load %arg3[%c4_50] : memref<9xf32, #tpu.memory_space<smem>>
    %160 = vector.broadcast %159 : f32 to vector<1x256xf32>
    %161 = arith.mulf %158, %160 : vector<1x256xf32>
    %162 = arith.addf %157, %161 : vector<1x256xf32>
    %163 = vector.extract_strided_slice %138 {offsets = [2, 0], sizes = [1, 256], strides = [1, 1]} : vector<3x256xf32> to vector<1x256xf32>
    %c5_51 = arith.constant 5 : index
    %164 = memref.load %arg3[%c5_51] : memref<9xf32, #tpu.memory_space<smem>>
    %165 = vector.broadcast %164 : f32 to vector<1x256xf32>
    %166 = arith.mulf %163, %165 : vector<1x256xf32>
    %167 = arith.addf %162, %166 : vector<1x256xf32>
    %c4_52 = arith.constant 4 : index
    %c0_53 = arith.constant 0 : index
    %168 = vector.load %arg5[%c4_52, %c0_53] : memref<6x256xf32, #tpu.memory_space<vmem>>, vector<1x256xf32>
    tpu.vector_store %arg5[%c4_52, %c0_53], %167 {strides = array<i32>} : memref<6x256xf32, #tpu.memory_space<vmem>>, vector<1x256xf32>,
    %169 = vector.extract_strided_slice %138 {offsets = [0, 0], sizes = [1, 256], strides = [1, 1]} : vector<3x256xf32> to vector<1x256xf32>
    %c6_54 = arith.constant 6 : index
    %170 = memref.load %arg3[%c6_54] : memref<9xf32, #tpu.memory_space<smem>>
    %171 = vector.broadcast %170 : f32 to vector<1x256xf32>
    %172 = arith.mulf %169, %171 : vector<1x256xf32>
    %173 = vector.extract_strided_slice %138 {offsets = [1, 0], sizes = [1, 256], strides = [1, 1]} : vector<3x256xf32> to vector<1x256xf32>
    %c7_55 = arith.constant 7 : index
    %174 = memref.load %arg3[%c7_55] : memref<9xf32, #tpu.memory_space<smem>>
    %175 = vector.broadcast %174 : f32 to vector<1x256xf32>
    %176 = arith.mulf %173, %175 : vector<1x256xf32>
    %177 = arith.addf %172, %176 : vector<1x256xf32>
    %178 = vector.extract_strided_slice %138 {offsets = [2, 0], sizes = [1, 256], strides = [1, 1]} : vector<3x256xf32> to vector<1x256xf32>
    %c8_56 = arith.constant 8 : index
    %179 = memref.load %arg3[%c8_56] : memref<9xf32, #tpu.memory_space<smem>>
    %180 = vector.broadcast %179 : f32 to vector<1x256xf32>
    %181 = arith.mulf %178, %180 : vector<1x256xf32>
    %182 = arith.addf %177, %181 : vector<1x256xf32>
    %c5_57 = arith.constant 5 : index
    %c0_58 = arith.constant 0 : index
    %183 = vector.load %arg5[%c5_57, %c0_58] : memref<6x256xf32, #tpu.memory_space<vmem>>, vector<1x256xf32>
    tpu.vector_store %arg5[%c5_57, %c0_58], %182 {strides = array<i32>} : memref<6x256xf32, #tpu.memory_space<vmem>>, vector<1x256xf32>,
    return
  }
}

</mosaic_0001>

<llo_original>
// kernel: tpu_custom_call.1
$region0: #{tpu_custom_call.1}
  #allocation0 [shape = 'u32[]', space=smem, size = 0x4, offset = 0x4, fixed_abs, tag = 'smem constant byte address 0x4 - core index']
  #allocation1 [shape = 'u32[72,128]{1,0:T(1,128)}', space=vmem, size = 0x9000, scoped, tag = 'internal scratch']
  %s0 = inlined_call_operand.hbm [shape: f32[6,256], index: 0, kind: input, shape index: {}]
  %s1 = inlined_call_operand.hbm [shape: f32[9], index: 1, kind: input, shape index: {}]
  %s2 = inlined_call_operand.hbm [shape: f32[6,256], index: 2, kind: input, shape index: {}]
  %s3 = inlined_call_operand.vmem [shape: f32[9], index: 3, kind: input, shape index: {}]
  %s4 = inlined_call_operand.hbm [shape: f32[6,256], index: 4, kind: output, shape index: {0}]
  %s5 = inlined_call_operand.hbm [shape: f32[6,256], index: 5, kind: output, shape index: {1}]
  %6 = xla_tuple %s4, %s5
  %s7 = sld [smem:[#allocation0]]
  $region50: #{tpu_custom_call.1} parent=0
    _
  %s9 = ssub.s32 1, %s7
  %s10 = scalar_select 0, %s9, %s7
  $region1: #{tpu_custom_call.1} parent=0
    #allocation2 [shape = 'u8[8192]{0}', space=vmem, size = 0x2000, scoped, tag = 'input window, operand 0, single buffered']
    #allocation3 [shape = 's32[1]{0}', space=sflag, size = 0x4, scoped, tag = 'scoped memory for tpu_custom_call.1']
    #allocation4 [shape = 's32[1]{0}', space=sflag, size = 0x4, scoped, tag = 'scoped memory for tpu_custom_call.1']
    #allocation5 [shape = 's32[1]{0}', space=sflag, size = 0x4, scoped, tag = 'scoped memory for tpu_custom_call.1']
    #allocation6 [shape = 's32[1]{0}', space=sflag, size = 0x4, scoped, tag = 'scoped memory for tpu_custom_call.1']
    #allocation7 [shape = 'u8[512]{0}', space=smem, size = 0x200, scoped, tag = 'input window, operand 1, single buffered']
    #allocation8 [shape = 'u8[8192]{0}', space=vmem, size = 0x2000, scoped, tag = 'input window, operand 2, single buffered']
    #allocation9 [shape = 's32[1]{0}', space=sflag, size = 0x4, scoped, tag = 'scoped memory for tpu_custom_call.1']
    #allocation10 [shape = 'u8[512]{0}', space=smem, size = 0x200, scoped, tag = 'input window, operand 3, single buffered']
    #allocation11 [shape = 'u8[8192]{0}', space=vmem, size = 0x2000, scoped, tag = 'output window, operand 0, single buffered']
    #allocation12 [shape = 'u8[8192]{0}', space=vmem, size = 0x2000, scoped, tag = 'output window, operand 1, single buffered']
    #allocation13 [shape = 's32[1]{0}', space=sflag, size = 0x4, scoped, tag = 'scoped memory for tpu_custom_call.1']
    %11 = vsyncpa [#allocation3], 0
    %12 = vsyncpa [#allocation5], 0
    %13 = vsyncpa [#allocation9], 0
    %14 = vsyncpa [#allocation6], 0
    %15 = vsyncpa [#allocation4], 0
    %16 = vsyncpa [#allocation13], 0
    // Predicated region
    $region2: #{tpu_custom_call.1} parent=1 // pred_check
      _
    $region3: #{tpu_custom_call.1} parent=1 // pred_check_branch
      %18 = sbr.rel (0) target = $region5
    $region4: #{tpu_custom_call.1} parent=1 // pred_region
      %20 = vsyncadd [#allocation3], 0
      %s22 = sshll.u32 %s0, 4
      %s23 = int_to_ptr.hbm [resolvable:$true] %s22
      %s24 = sshll.u32 [#allocation2], 4
      %s25 = int_to_ptr.vmem [resolvable:$true] %s24
      %27 = dma.hbm_to_vmem [thread:$0]  %s23, 256, %s25, [#allocation3]
    $region5: #{tpu_custom_call.1} parent=1 // pred_fallthru
      _
    // Predicated region
    $region6: #{tpu_custom_call.1} parent=1 // pred_check
      _
    $region7: #{tpu_custom_call.1} parent=1 // pred_check_branch
      %29 = sbr.rel (0) target = $region9
    $region8: #{tpu_custom_call.1} parent=1 // pred_region
      %31 = vsyncadd [#allocation5], 0
      %s33 = sshll.u32 %s1, 4
      %s34 = int_to_ptr.hbm [resolvable:$true] %s33
      %36 = dma.hbm_to_smem %s34, 16, [#allocation7], [#allocation5]
    $region9: #{tpu_custom_call.1} parent=1 // pred_fallthru
      _
    // Predicated region
    $region10: #{tpu_custom_call.1} parent=1 // pred_check
      _
    $region11: #{tpu_custom_call.1} parent=1 // pred_check_branch
      %38 = sbr.rel (0) target = $region13
    $region12: #{tpu_custom_call.1} parent=1 // pred_region
      %40 = vsyncadd [#allocation9], 0
      %s42 = sshll.u32 %s2, 4
      %s43 = int_to_ptr.hbm [resolvable:$true] %s42
      %s44 = sshll.u32 [#allocation8], 4
      %s45 = int_to_ptr.vmem [resolvable:$true] %s44
      %47 = dma.hbm_to_vmem [thread:$0]  %s43, 256, %s45, [#allocation9]
    $region13: #{tpu_custom_call.1} parent=1 // pred_fallthru
      _
    // Predicated region
    $region14: #{tpu_custom_call.1} parent=1 // pred_check
      _
    $region15: #{tpu_custom_call.1} parent=1 // pred_check_branch
      %49 = sbr.rel (0) target = $region17
    $region16: #{tpu_custom_call.1} parent=1 // pred_region
      %51 = vsyncadd [#allocation6], 0
      %s53 = sshll.u32 %s3, 4
      %s54 = int_to_ptr.vmem [resolvable:$true] %s53
      %56 = dma.vmem_to_smem %s54, 16, [#allocation10], [#allocation6]
    $region17: #{tpu_custom_call.1} parent=1 // pred_fallthru
      _
    // Predicated region
    $region18: #{tpu_custom_call.1} parent=1 // pred_check
      _
    $region19: #{tpu_custom_call.1} parent=1 // pred_check_branch
      %58 = sbr.rel (0) target = $region21
    $region20: #{tpu_custom_call.1} parent=1 // pred_region
      %60 = dma.done [#allocation3], 256
    $region21: #{tpu_custom_call.1} parent=1 // pred_fallthru
      _
    // Predicated region
    $region22: #{tpu_custom_call.1} parent=1 // pred_check
      _
    $region23: #{tpu_custom_call.1} parent=1 // pred_check_branch
      %62 = sbr.rel (0) target = $region25
    $region24: #{tpu_custom_call.1} parent=1 // pred_region
      %64 = dma.done [#allocation5], 16
    $region25: #{tpu_custom_call.1} parent=1 // pred_fallthru
      _
    // Predicated region
    $region26: #{tpu_custom_call.1} parent=1 // pred_check
      _
    $region27: #{tpu_custom_call.1} parent=1 // pred_check_branch
      %66 = sbr.rel (0) target = $region29
    $region28: #{tpu_custom_call.1} parent=1 // pred_region
      %68 = dma.done [#allocation9], 256
    $region29: #{tpu_custom_call.1} parent=1 // pred_fallthru
      _
    // Predicated region
    $region30: #{tpu_custom_call.1} parent=1 // pred_check
      _
    $region31: #{tpu_custom_call.1} parent=1 // pred_check_branch
      %70 = sbr.rel (0) target = $region33
    $region32: #{tpu_custom_call.1} parent=1 // pred_region
      %72 = dma.done [#allocation6], 16
    $region33: #{tpu_custom_call.1} parent=1 // pred_fallthru
      _
    %73 = sfence
    %v74 = vld [vmem:[#allocation2] sm:$0x7]
    %v75 = vld [vmem:[#allocation2 + $0x8] sm:$0x7]
    %s76 = sld [smem:[#allocation7]]
    %v77 = vstv %s76
    %v78 = vmul.f32 %v74, %v77
    %v79 = vmul.f32 %v75, %v77
    %s80 = sld [smem:[#allocation7 + $0x1]]
    %v81 = vstv %s80
    %v82 = vmul.f32 %v74, %v81
    %v83 = vmul.f32 %v75, %v81
    %v86 = vrot.slane %v82, 1
    %v87 = vrot.slane %v83, 1
    %v90 = vadd.f32 %v78, %v86
    %v91 = vadd.f32 %v79, %v87
    %s92 = sld [smem:[#allocation7 + $0x2]]
    %v93 = vstv %s92
    %v94 = vmul.f32 %v74, %v93
    %v95 = vmul.f32 %v75, %v93
    %v98 = vrot.slane %v94, 2
    %v99 = vrot.slane %v95, 2
    %v102 = vadd.f32 %v90, %v98
    %v103 = vadd.f32 %v91, %v99
    %v106 = vrot.slane %v103, 7
    %vm107 = vcmask 1040384
    %v108 = vsel %vm107, %v102, %v106
    %v110 = vlaneseq
    %vm111 = vcmp.ge.s32.totalorder %v110, 0
    %vm112 = vcmp.lt.s32.totalorder %v110, 256
    %vm113 = vmand %vm111, %vm112
    %114 = vst.msk [vmem:[#allocation11] ss:$8 sm:$0x3] %vm113, %v108
    %115 = vst.msk [vmem:[#allocation11] ss:$8 sm:$0x0] %vm113, %v108
    %s116 = sld [smem:[#allocation7 + $0x3]]
    %v117 = vstv %s116
    %v118 = vmul.f32 %v74, %v117
    %v119 = vmul.f32 %v75, %v117
    %s120 = sld [smem:[#allocation7 + $0x4]]
    %v121 = vstv %s120
    %v122 = vmul.f32 %v74, %v121
    %v123 = vmul.f32 %v75, %v121
    %v126 = vrot.slane %v122, 1
    %v127 = vrot.slane %v123, 1
    %v130 = vadd.f32 %v118, %v126
    %v131 = vadd.f32 %v119, %v127
    %s132 = sld [smem:[#allocation7 + $0x5]]
    %v133 = vstv %s132
    %v134 = vmul.f32 %v74, %v133
    %v135 = vmul.f32 %v75, %v133
    %v138 = vrot.slane %v134, 2
    %v139 = vrot.slane %v135, 2
    %v142 = vadd.f32 %v130, %v138
    %v143 = vadd.f32 %v131, %v139
    %v146 = vrot.slane %v143, 7
    %v147 = vsel %vm107, %v142, %v146
    %s149 = scalar_lea.vmem [#allocation11], 1
    %150 = vst.msk [vmem:[%s149] ss:$8 sm:$0x3] %vm113, %v147
    %151 = vst.msk [vmem:[%s149] ss:$8 sm:$0x0] %vm113, %v147
    %s152 = sld [smem:[#allocation7 + $0x6]]
    %v153 = vstv %s152
    %v154 = vmul.f32 %v74, %v153
    %v155 = vmul.f32 %v75, %v153
    %s156 = sld [smem:[#allocation7 + $0x7]]
    %v157 = vstv %s156
    %v158 = vmul.f32 %v74, %v157
    %v159 = vmul.f32 %v75, %v157
    %v162 = vrot.slane %v158, 1
    %v163 = vrot.slane %v159, 1
    %v166 = vadd.f32 %v154, %v162
    %v167 = vadd.f32 %v155, %v163
    %s168 = sld [smem:[#allocation7 + $0x8]]
    %v169 = vstv %s168
    %v170 = vmul.f32 %v74, %v169
    %v171 = vmul.f32 %v75, %v169
    %v174 = vrot.slane %v170, 2
    %v175 = vrot.slane %v171, 2
    %v178 = vadd.f32 %v166, %v174
    %v179 = vadd.f32 %v167, %v175
    %v182 = vrot.slane %v179, 7
    %v183 = vsel %vm107, %v178, %v182
    %s185 = scalar_lea.vmem [#allocation11], 2
    %186 = vst.msk [vmem:[%s185] ss:$8 sm:$0x3] %vm113, %v183
    %187 = vst.msk [vmem:[%s185] ss:$8 sm:$0x0] %vm113, %v183
    %v188 = vld [vmem:[#allocation2] sm:$0x38]
    %v189 = vld [vmem:[#allocation2 + $0x8] sm:$0x38]
    %s190 = sld [smem:[#allocation7]]
    %v191 = vstv %s190
    %v192 = vmul.f32 %v188, %v191
    %v193 = vmul.f32 %v189, %v191
    %s194 = sld [smem:[#allocation7 + $0x1]]
    %v195 = vstv %s194
    %v196 = vmul.f32 %v188, %v195
    %v197 = vmul.f32 %v189, %v195
    %v200 = vrot.slane %v196, 1
    %v201 = vrot.slane %v197, 1
    %v204 = vadd.f32 %v192, %v200
    %v205 = vadd.f32 %v193, %v201
    %s206 = sld [smem:[#allocation7 + $0x2]]
    %v207 = vstv %s206
    %v208 = vmul.f32 %v188, %v207
    %v209 = vmul.f32 %v189, %v207
    %v212 = vrot.slane %v208, 2
    %v213 = vrot.slane %v209, 2
    %v216 = vadd.f32 %v204, %v212
    %v217 = vadd.f32 %v205, %v213
    %220 = vst [vmem:[#allocation1] sm:$0xff] %v216
    %221 = vst [vmem:[#allocation1 + $0x9] sm:$0xff] %v217
    %s222 = scalar_lea.vmem [#allocation1], 3
    %v223 = vld [vmem:[%s222] ss:$9 sm:$0xff]
    %s225 = scalar_lea.vmem [#allocation11], 3
    %226 = vst.msk [vmem:[%s225] ss:$8 sm:$0x3] %vm113, %v223
    %227 = vst.msk [vmem:[%s225] ss:$8 sm:$0x0] %vm113, %v223
    %s228 = sld [smem:[#allocation7 + $0x3]]
    %v229 = vstv %s228
    %v230 = vmul.f32 %v188, %v229
    %v231 = vmul.f32 %v189, %v229
    %s232 = sld [smem:[#allocation7 + $0x4]]
    %v233 = vstv %s232
    %v234 = vmul.f32 %v188, %v233
    %v235 = vmul.f32 %v189, %v233
    %v238 = vrot.slane %v234, 1
    %v239 = vrot.slane %v235, 1
    %v242 = vadd.f32 %v230, %v238
    %v243 = vadd.f32 %v231, %v239
    %s244 = sld [smem:[#allocation7 + $0x5]]
    %v245 = vstv %s244
    %v246 = vmul.f32 %v188, %v245
    %v247 = vmul.f32 %v189, %v245
    %v250 = vrot.slane %v246, 2
    %v251 = vrot.slane %v247, 2
    %v254 = vadd.f32 %v242, %v250
    %v255 = vadd.f32 %v243, %v251
    %258 = vst [vmem:[#allocation1] sm:$0xff] %v254
    %259 = vst [vmem:[#allocation1 + $0x9] sm:$0xff] %v255
    %s260 = scalar_lea.vmem [#allocation1], 3
    %v261 = vld [vmem:[%s260] ss:$9 sm:$0xff]
    %s263 = scalar_lea.vmem [#allocation11], 4
    %264 = vst.msk [vmem:[%s263] ss:$8 sm:$0x3] %vm113, %v261
    %265 = vst.msk [vmem:[%s263] ss:$8 sm:$0x0] %vm113, %v261
    %s266 = sld [smem:[#allocation7 + $0x6]]
    %v267 = vstv %s266
    %v268 = vmul.f32 %v188, %v267
    %v269 = vmul.f32 %v189, %v267
    %s270 = sld [smem:[#allocation7 + $0x7]]
    %v271 = vstv %s270
    %v272 = vmul.f32 %v188, %v271
    %v273 = vmul.f32 %v189, %v271
    %v276 = vrot.slane %v272, 1
    %v277 = vrot.slane %v273, 1
    %v280 = vadd.f32 %v268, %v276
    %v281 = vadd.f32 %v269, %v277
    %s282 = sld [smem:[#allocation7 + $0x8]]
    %v283 = vstv %s282
    %v284 = vmul.f32 %v188, %v283
    %v285 = vmul.f32 %v189, %v283
    %v288 = vrot.slane %v284, 2
    %v289 = vrot.slane %v285, 2
    %v292 = vadd.f32 %v280, %v288
    %v293 = vadd.f32 %v281, %v289
    %296 = vst [vmem:[#allocation1] sm:$0xff] %v292
    %297 = vst [vmem:[#allocation1 + $0x9] sm:$0xff] %v293
    %s298 = scalar_lea.vmem [#allocation1], 3
    %v299 = vld [vmem:[%s298] ss:$9 sm:$0xff]
    %s301 = scalar_lea.vmem [#allocation11], 5
    %302 = vst.msk [vmem:[%s301] ss:$8 sm:$0x3] %vm113, %v299
    %303 = vst.msk [vmem:[%s301] ss:$8 sm:$0x0] %vm113, %v299
    %v304 = vld [vmem:[#allocation8] sm:$0x7]
    %v305 = vld [vmem:[#allocation8 + $0x8] sm:$0x7]
    %s306 = sld [smem:[#allocation10]]
    %v307 = vstv %s306
    %v308 = vmul.f32 %v304, %v307
    %v309 = vmul.f32 %v305, %v307
    %s310 = sld [smem:[#allocation10 + $0x1]]
    %v311 = vstv %s310
    %v312 = vmul.f32 %v304, %v311
    %v313 = vmul.f32 %v305, %v311
    %v316 = vrot.slane %v312, 1
    %v317 = vrot.slane %v313, 1
    %v320 = vadd.f32 %v308, %v316
    %v321 = vadd.f32 %v309, %v317
    %s322 = sld [smem:[#allocation10 + $0x2]]
    %v323 = vstv %s322
    %v324 = vmul.f32 %v304, %v323
    %v325 = vmul.f32 %v305, %v323
    %v328 = vrot.slane %v324, 2
    %v329 = vrot.slane %v325, 2
    %v332 = vadd.f32 %v320, %v328
    %v333 = vadd.f32 %v321, %v329
    %v336 = vrot.slane %v333, 7
    %v337 = vsel %vm107, %v332, %v336
    %339 = vst.msk [vmem:[#allocation12] ss:$8 sm:$0x3] %vm113, %v337
    %340 = vst.msk [vmem:[#allocation12] ss:$8 sm:$0x0] %vm113, %v337
    %s341 = sld [smem:[#allocation10 + $0x3]]
    %v342 = vstv %s341
    %v343 = vmul.f32 %v304, %v342
    %v344 = vmul.f32 %v305, %v342
    %s345 = sld [smem:[#allocation10 + $0x4]]
    %v346 = vstv %s345
    %v347 = vmul.f32 %v304, %v346
    %v348 = vmul.f32 %v305, %v346
    %v351 = vrot.slane %v347, 1
    %v352 = vrot.slane %v348, 1
    %v355 = vadd.f32 %v343, %v351
    %v356 = vadd.f32 %v344, %v352
    %s357 = sld [smem:[#allocation10 + $0x5]]
    %v358 = vstv %s357
    %v359 = vmul.f32 %v304, %v358
    %v360 = vmul.f32 %v305, %v358
    %v363 = vrot.slane %v359, 2
    %v364 = vrot.slane %v360, 2
    %v367 = vadd.f32 %v355, %v363
    %v368 = vadd.f32 %v356, %v364
    %v371 = vrot.slane %v368, 7
    %v372 = vsel %vm107, %v367, %v371
    %s374 = scalar_lea.vmem [#allocation12], 1
    %375 = vst.msk [vmem:[%s374] ss:$8 sm:$0x3] %vm113, %v372
    %376 = vst.msk [vmem:[%s374] ss:$8 sm:$0x0] %vm113, %v372
    %s377 = sld [smem:[#allocation10 + $0x6]]
    %v378 = vstv %s377
    %v379 = vmul.f32 %v304, %v378
    %v380 = vmul.f32 %v305, %v378
    %s381 = sld [smem:[#allocation10 + $0x7]]
    %v382 = vstv %s381
    %v383 = vmul.f32 %v304, %v382
    %v384 = vmul.f32 %v305, %v382
    %v387 = vrot.slane %v383, 1
    %v388 = vrot.slane %v384, 1
    %v391 = vadd.f32 %v379, %v387
    %v392 = vadd.f32 %v380, %v388
    %s393 = sld [smem:[#allocation10 + $0x8]]
    %v394 = vstv %s393
    %v395 = vmul.f32 %v304, %v394
    %v396 = vmul.f32 %v305, %v394
    %v399 = vrot.slane %v395, 2
    %v400 = vrot.slane %v396, 2
    %v403 = vadd.f32 %v391, %v399
    %v404 = vadd.f32 %v392, %v400
    %v407 = vrot.slane %v404, 7
    %v408 = vsel %vm107, %v403, %v407
    %s410 = scalar_lea.vmem [#allocation12], 2
    %411 = vst.msk [vmem:[%s410] ss:$8 sm:$0x3] %vm113, %v408
    %412 = vst.msk [vmem:[%s410] ss:$8 sm:$0x0] %vm113, %v408
    %v413 = vld [vmem:[#allocation8] sm:$0x38]
    %v414 = vld [vmem:[#allocation8 + $0x8] sm:$0x38]
    %s415 = sld [smem:[#allocation10]]
    %v416 = vstv %s415
    %v417 = vmul.f32 %v413, %v416
    %v418 = vmul.f32 %v414, %v416
    %s419 = sld [smem:[#allocation10 + $0x1]]
    %v420 = vstv %s419
    %v421 = vmul.f32 %v413, %v420
    %v422 = vmul.f32 %v414, %v420
    %v425 = vrot.slane %v421, 1
    %v426 = vrot.slane %v422, 1
    %v429 = vadd.f32 %v417, %v425
    %v430 = vadd.f32 %v418, %v426
    %s431 = sld [smem:[#allocation10 + $0x2]]
    %v432 = vstv %s431
    %v433 = vmul.f32 %v413, %v432
    %v434 = vmul.f32 %v414, %v432
    %v437 = vrot.slane %v433, 2
    %v438 = vrot.slane %v434, 2
    %v441 = vadd.f32 %v429, %v437
    %v442 = vadd.f32 %v430, %v438
    %445 = vst [vmem:[#allocation1] sm:$0xff] %v441
    %446 = vst [vmem:[#allocation1 + $0x9] sm:$0xff] %v442
    %s447 = scalar_lea.vmem [#allocation1], 3
    %v448 = vld [vmem:[%s447] ss:$9 sm:$0xff]
    %s450 = scalar_lea.vmem [#allocation12], 3
    %451 = vst.msk [vmem:[%s450] ss:$8 sm:$0x3] %vm113, %v448
    %452 = vst.msk [vmem:[%s450] ss:$8 sm:$0x0] %vm113, %v448
    %s453 = sld [smem:[#allocation10 + $0x3]]
    %v454 = vstv %s453
    %v455 = vmul.f32 %v413, %v454
    %v456 = vmul.f32 %v414, %v454
    %s457 = sld [smem:[#allocation10 + $0x4]]
    %v458 = vstv %s457
    %v459 = vmul.f32 %v413, %v458
    %v460 = vmul.f32 %v414, %v458
    %v463 = vrot.slane %v459, 1
    %v464 = vrot.slane %v460, 1
    %v467 = vadd.f32 %v455, %v463
    %v468 = vadd.f32 %v456, %v464
    %s469 = sld [smem:[#allocation10 + $0x5]]
    %v470 = vstv %s469
    %v471 = vmul.f32 %v413, %v470
    %v472 = vmul.f32 %v414, %v470
    %v475 = vrot.slane %v471, 2
    %v476 = vrot.slane %v472, 2
    %v479 = vadd.f32 %v467, %v475
    %v480 = vadd.f32 %v468, %v476
    %483 = vst [vmem:[#allocation1] sm:$0xff] %v479
    %484 = vst [vmem:[#allocation1 + $0x9] sm:$0xff] %v480
    %s485 = scalar_lea.vmem [#allocation1], 3
    %v486 = vld [vmem:[%s485] ss:$9 sm:$0xff]
    %s488 = scalar_lea.vmem [#allocation12], 4
    %489 = vst.msk [vmem:[%s488] ss:$8 sm:$0x3] %vm113, %v486
    %490 = vst.msk [vmem:[%s488] ss:$8 sm:$0x0] %vm113, %v486
    %s491 = sld [smem:[#allocation10 + $0x6]]
    %v492 = vstv %s491
    %v493 = vmul.f32 %v413, %v492
    %v494 = vmul.f32 %v414, %v492
    %s495 = sld [smem:[#allocation10 + $0x7]]
    %v496 = vstv %s495
    %v497 = vmul.f32 %v413, %v496
    %v498 = vmul.f32 %v414, %v496
    %v501 = vrot.slane %v497, 1
    %v502 = vrot.slane %v498, 1
    %v505 = vadd.f32 %v493, %v501
    %v506 = vadd.f32 %v494, %v502
    %s507 = sld [smem:[#allocation10 + $0x8]]
    %v508 = vstv %s507
    %v509 = vmul.f32 %v413, %v508
    %v510 = vmul.f32 %v414, %v508
    %v513 = vrot.slane %v509, 2
    %v514 = vrot.slane %v510, 2
    %v517 = vadd.f32 %v505, %v513
    %v518 = vadd.f32 %v506, %v514
    %521 = vst [vmem:[#allocation1] sm:$0xff] %v517
    %522 = vst [vmem:[#allocation1 + $0x9] sm:$0xff] %v518
    %s523 = scalar_lea.vmem [#allocation1], 3
    %v524 = vld [vmem:[%s523] ss:$9 sm:$0xff]
    %s526 = scalar_lea.vmem [#allocation12], 5
    %527 = vst.msk [vmem:[%s526] ss:$8 sm:$0x3] %vm113, %v524
    %528 = vst.msk [vmem:[%s526] ss:$8 sm:$0x0] %vm113, %v524
    // Predicated region
    $region34: #{tpu_custom_call.1} parent=1 // pred_check
      _
    $region35: #{tpu_custom_call.1} parent=1 // pred_check_branch
      %530 = sbr.rel (0) target = $region37
    $region36: #{tpu_custom_call.1} parent=1 // pred_region
      %532 = vsyncadd [#allocation4], 0
      %s534 = sshll.u32 [#allocation11], 4
      %s535 = int_to_ptr.vmem [resolvable:$true] %s534
      %s536 = sshll.u32 %s4, 4
      %s537 = int_to_ptr.hbm [resolvable:$true] %s536
      %539 = dma.vmem_to_hbm [thread:$0]  %s535, 256, %s537, [#allocation4]
    $region37: #{tpu_custom_call.1} parent=1 // pred_fallthru
      _
    // Predicated region
    $region38: #{tpu_custom_call.1} parent=1 // pred_check
      _
    $region39: #{tpu_custom_call.1} parent=1 // pred_check_branch
      %541 = sbr.rel (0) target = $region41
    $region40: #{tpu_custom_call.1} parent=1 // pred_region
      %543 = vsyncadd [#allocation13], 0
      %s545 = sshll.u32 [#allocation12], 4
      %s546 = int_to_ptr.vmem [resolvable:$true] %s545
      %s547 = sshll.u32 %s5, 4
      %s548 = int_to_ptr.hbm [resolvable:$true] %s547
      %550 = dma.vmem_to_hbm [thread:$0]  %s546, 256, %s548, [#allocation13]
    $region41: #{tpu_custom_call.1} parent=1 // pred_fallthru
      _
    // Predicated region
    $region42: #{tpu_custom_call.1} parent=1 // pred_check
      _
    $region43: #{tpu_custom_call.1} parent=1 // pred_check_branch
      %552 = sbr.rel (0) target = $region45
    $region44: #{tpu_custom_call.1} parent=1 // pred_region
      %554 = dma.done [#allocation4], 256
    $region45: #{tpu_custom_call.1} parent=1 // pred_fallthru
      _
    // Predicated region
    $region46: #{tpu_custom_call.1} parent=1 // pred_check
      _
    $region47: #{tpu_custom_call.1} parent=1 // pred_check_branch
      %556 = sbr.rel (0) target = $region49
    $region48: #{tpu_custom_call.1} parent=1 // pred_region
      %558 = dma.done [#allocation13], 256
    $region49: #{tpu_custom_call.1} parent=1 // pred_fallthru
      _
    %559 = vsyncpa [#allocation3], 1
    %560 = vsyncpa [#allocation9], 1
    %561 = vsyncpa [#allocation4], 1
    %562 = vsyncpa [#allocation13], 1
    %563 = vsyncpa [#allocation5], 1
    %564 = vsyncpa [#allocation6], 1

</llo_original>
